<compile_context>
chip_gen: v6e
topology: v6e:2x2x1
jax: 0.10.0
libtpu: 0.0.40
codegen_flags: <defaults>
</compile_context>

<pallas_src>
import jax
import jax.numpy as jnp
from jax.experimental import pallas as pl
from jax.experimental.pallas import tpu as pltpu

_LANE = 128     # vreg lane width  (last dim)
_SUBLANE = 8    # vreg sublane count (second-to-last dim)


def _round_up(n, m):
    return pl.cdiv(n, m) * m


def _one_layer_kernel(x_ref, wt_ref, b_ref, o_ref):
    # x_ref:  (Bp, NIN)        activations
    # wt_ref: (NIN, NOUTp)     pre-transposed, lane-dense weights
    # b_ref:  (1, NOUTp)       pre-padded bias
    # o_ref:  (Bp, NOUTp)      lane-dense output -> full unmasked `vst`
    y = jnp.dot(x_ref[...], wt_ref[...], preferred_element_type=jnp.float32)
    y = y + b_ref[...]                              # broadcast bias over batch
    # sigmoid(y) = 0.5 * tanh(0.5 * y) + 0.5  -> single EUP op.
    o_ref[...] = (0.5 * jnp.tanh(0.5 * y) + 0.5).astype(o_ref.dtype)


def make_one_layer_network(w, b):
    """Build a jitted forward for PyTorch OneLayerNetwork.

    w: (NOUT, NIN) f32 (nn.Linear layout), b: (NOUT,) f32.
    Parameter padding / transpose happens ONCE here (init time), not per call.
    Returns forward(x: (B, NIN) f32) -> (B, NOUT) f32 = sigmoid(x @ w.T + b).
    """
    NOUT, NIN = w.shape
    nout_pad = _round_up(NOUT, _LANE)

    # One-time parameter prep (hoisted out of the per-call path):
    #   W^T padded to 128-lane NOUT  -> standard MXU contraction, no vxpose,
    #   lane-dense weight tile and lane-dense output store.
    wt_p = jnp.zeros((NIN, nout_pad), dtype=jnp.float32).at[:, :NOUT].set(
        jnp.asarray(w, jnp.float32).T)
    bias_2d = jnp.zeros((1, nout_pad), dtype=jnp.float32).at[:, :NOUT].set(
        jnp.asarray(b, jnp.float32))
    wt_p = jax.block_until_ready(wt_p)
    bias_2d = jax.block_until_ready(bias_2d)

    @jax.jit
    def forward(x):
        B = x.shape[0]
        b_pad = _round_up(B, _SUBLANE)
        x_p = x if b_pad == B else jnp.pad(x, ((0, b_pad - B), (0, 0)))

        # Whole problem fits in VMEM as one block -> no grid at all (a
        # degenerate grid=(1,) would only add ~600-cycle pipeline scaffolding).
        out = pl.pallas_call(
            _one_layer_kernel,
            out_shape=jax.ShapeDtypeStruct((b_pad, nout_pad), jnp.float32),
            in_specs=[
                pl.BlockSpec(memory_space=pltpu.MemorySpace.VMEM),   # x
                pl.BlockSpec(memory_space=pltpu.MemorySpace.VMEM),   # W^T
                pl.BlockSpec(memory_space=pltpu.MemorySpace.VMEM),   # bias
            ],
            out_specs=pl.BlockSpec(memory_space=pltpu.MemorySpace.VMEM),
        )(x_p, wt_p, bias_2d)

        # TODO(synk): at production sizes switch to an (M, N, K) grid with an
        # f32 VMEM accumulator initialized with the bias under pl.when(k==0),
        # bf16 MXU feeds on v6e/v7x (256-multiple tiles; 128 on v5e),
        # dimension_semantics=("parallel","parallel","arbitrary") so M/N shard
        # across v7x's 2 TensorCores, and tiles re-budgeted for v7x's 64 MiB
        # VMEM (double-buffered inputs + accumulator + output).
        return out[:B, :NOUT]

    return forward


if __name__ == "__main__":
    # Shapes implied by the module: Linear(nin, nout=10) on flat features.
    B, NIN, NOUT = 8, 32, 10

    key = jax.random.PRNGKey(0)
    kx, kw, kb = jax.random.split(key, 3)

    # Deterministic parameter init (PyTorch-style uniform bound 1/sqrt(nin)).
    bound = 1.0 / (NIN ** 0.5)
    x = jax.random.normal(kx, (B, NIN), dtype=jnp.float32)
    w = jax.random.uniform(kw, (NOUT, NIN), minval=-bound, maxval=bound,
                           dtype=jnp.float32)
    b = jax.random.uniform(kb, (NOUT,), minval=-bound, maxval=bound,
                           dtype=jnp.float32)

    forward = make_one_layer_network(w, b)   # params padded/transposed once
    out = forward(x)
    out = jax.block_until_ready(out)

    # Sanity check against plain-JAX reference (EUP tanh vs XLA sigmoid:
    # allow a slightly looser tolerance for the hardware transcendental).
    ref = jax.nn.sigmoid(x @ w.T + b)
    assert out.shape == (B, NOUT)
    assert jnp.allclose(out, ref, atol=1e-4, rtol=1e-4), float(
        jnp.max(jnp.abs(out - ref)))

    print("KERNEL_OK")
</pallas_src>

<mosaic_0001>
module attributes {stable_mosaic.version = 11 : i64} {
  func.func @_one_layer_kernel(%arg0: memref<8x32xf32, #tpu.memory_space<vmem>>, %arg1: memref<32x128xf32, #tpu.memory_space<vmem>>, %arg2: memref<1x128xf32, #tpu.memory_space<vmem>>, %arg3: memref<8x128xf32, #tpu.memory_space<vmem>>) attributes {dimension_semantics = [], scalar_prefetch = 0 : i64, scratch_operands = 0 : i64, tpu.core_type = #tpu.core_type<tc>} {
    %c0 = arith.constant 0 : index
    %c0_0 = arith.constant 0 : index
    %0 = vector.load %arg0[%c0, %c0_0] : memref<8x32xf32, #tpu.memory_space<vmem>>, vector<8x32xf32>
    %c0_1 = arith.constant 0 : index
    %c0_2 = arith.constant 0 : index
    %1 = vector.load %arg1[%c0_1, %c0_2] : memref<32x128xf32, #tpu.memory_space<vmem>>, vector<32x128xf32>
    %cst = arith.constant dense<0.000000e+00> : vector<8x128xf32>
    %2 = tpu.matmul %0, %1, %cst {dimension_numbers = #tpu.dot_dimension_numbers<[1], [0], [0], [1], [0, 0, 1, 1], [], []>} : vector<8x32xf32>, vector<32x128xf32>, vector<8x128xf32> -> vector<8x128xf32>
    %c0_3 = arith.constant 0 : index
    %c0_4 = arith.constant 0 : index
    %3 = vector.load %arg2[%c0_3, %c0_4] : memref<1x128xf32, #tpu.memory_space<vmem>>, vector<1x128xf32>
    %4 = vector.broadcast %3 : vector<1x128xf32> to vector<8x128xf32>
    %5 = arith.addf %2, %4 : vector<8x128xf32>
    %cst_5 = arith.constant 5.000000e-01 : f32
    %6 = vector.broadcast %cst_5 : f32 to vector<8x128xf32>
    %7 = arith.mulf %6, %5 : vector<8x128xf32>
    %8 = math.tanh %7 : vector<8x128xf32>
    %cst_6 = arith.constant 5.000000e-01 : f32
    %9 = vector.broadcast %cst_6 : f32 to vector<8x128xf32>
    %10 = arith.mulf %9, %8 : vector<8x128xf32>
    %cst_7 = arith.constant 5.000000e-01 : f32
    %11 = vector.broadcast %cst_7 : f32 to vector<8x128xf32>
    %12 = arith.addf %10, %11 : vector<8x128xf32>
    %c0_8 = arith.constant 0 : index
    %c0_9 = arith.constant 0 : index
    %13 = vector.load %arg3[%c0_8, %c0_9] : memref<8x128xf32, #tpu.memory_space<vmem>>, vector<8x128xf32>
    tpu.vector_store %arg3[%c0_8, %c0_9], %12 {strides = array<i32>} : memref<8x128xf32, #tpu.memory_space<vmem>>, vector<8x128xf32>,
    return
  }
}

</mosaic_0001>

<llo_original>
// kernel: forward.1
$region0: #{forward.1}
  #allocation0 [shape = 'u32[]', space=smem, size = 0x4, offset = 0x4, fixed_abs, tag = 'smem constant byte address 0x4 - core index']
  #allocation1 [shape = 'u32[144,128]{1,0:T(1,128)}', space=vmem, size = 0x12000, scoped, tag = 'internal scratch']
  %s0 = inlined_call_operand.hbm [shape: f32[8,32], index: 0, kind: input, shape index: {}]
  %s1 = inlined_call_operand.hbm [shape: f32[32,128], index: 1, kind: input, shape index: {}]
  %s2 = inlined_call_operand.vmem [shape: f32[1,128], index: 2, kind: input, shape index: {}]
  %s3 = inlined_call_operand.hbm [shape: f32[8,128], index: 3, kind: output, shape index: {}]
  %s4 = sld [smem:[#allocation0]]
  $region30: #{forward.1} parent=0
    _
  %s6 = ssub.s32 1, %s4
  %s7 = scalar_select 0, %s6, %s4
  $region1: #{forward.1} parent=0
    #allocation2 [shape = 'u8[4096]{0}', space=vmem, size = 0x1000, scoped, tag = 'input window, operand 0, single buffered']
    #allocation3 [shape = 's32[1]{0}', space=sflag, size = 0x4, scoped, tag = 'scoped memory for forward.1']
    #allocation4 [shape = 's32[1]{0}', space=sflag, size = 0x4, scoped, tag = 'scoped memory for forward.1']
    #allocation5 [shape = 'u8[16384]{0}', space=vmem, size = 0x4000, scoped, tag = 'input window, operand 1, single buffered']
    #allocation6 [shape = 's32[1]{0}', space=sflag, size = 0x4, scoped, tag = 'scoped memory for forward.1']
    #allocation7 [shape = 'u8[4096]{0}', space=vmem, size = 0x1000, scoped, tag = 'output window, operand 0, single buffered']
    %8 = vsyncpa [#allocation3], 0
    %9 = vsyncpa [#allocation6], 0
    %10 = vsyncpa [#allocation4], 0
    // Predicated region
    $region2: #{forward.1} parent=1 // pred_check
      _
    $region3: #{forward.1} parent=1 // pred_check_branch
      %12 = sbr.rel (0) target = $region5
    $region4: #{forward.1} parent=1 // pred_region
      %s14 = ssub.s32 128, 128
      %15 = vsyncadd [#allocation3], %s14
      %s17 = sshll.u32 [#allocation2], 4
      %s18 = int_to_ptr.vmem [resolvable:$true] %s17
      %20 = dma.hbm_to_vmem [thread:$0]  %s0, 128, %s18, [#allocation3]
    $region5: #{forward.1} parent=1 // pred_fallthru
      _
    // Predicated region
    $region6: #{forward.1} parent=1 // pred_check
      _
    $region7: #{forward.1} parent=1 // pred_check_branch
      %22 = sbr.rel (0) target = $region9
    $region8: #{forward.1} parent=1 // pred_region
      %s24 = ssub.s32 512, 512
      %25 = vsyncadd [#allocation6], %s24
      %s26 = sshll.u32 [#allocation5], 4
      %s27 = int_to_ptr.vmem [resolvable:$true] %s26
      %32 = dma.hbm_to_vmem [thread:$0]  %s1, 512, %s27, [#allocation6], 128, 128, 8
    $region9: #{forward.1} parent=1 // pred_fallthru
      _
    // Predicated region
    $region10: #{forward.1} parent=1 // pred_check
      _
    $region11: #{forward.1} parent=1 // pred_check_branch
      %34 = sbr.rel (0) target = $region13
    $region12: #{forward.1} parent=1 // pred_region
      _
    $region13: #{forward.1} parent=1 // pred_fallthru
      _
    // Predicated region
    $region14: #{forward.1} parent=1 // pred_check
      _
    $region15: #{forward.1} parent=1 // pred_check_branch
      %36 = sbr.rel (0) target = $region17
    $region16: #{forward.1} parent=1 // pred_region
      %37 = dma.done [#allocation3], 128
    $region17: #{forward.1} parent=1 // pred_fallthru
      _
    // Predicated region
    $region18: #{forward.1} parent=1 // pred_check
      _
    $region19: #{forward.1} parent=1 // pred_check_branch
      %39 = sbr.rel (0) target = $region21
    $region20: #{forward.1} parent=1 // pred_region
      %40 = dma.done [#allocation6], 512
    $region21: #{forward.1} parent=1 // pred_fallthru
      _
    %v41 = vld [vmem:[#allocation2] sm:$0xff]
    %v42 = vld [vmem:[#allocation5] sm:$0xff]
    %v43 = vld [vmem:[#allocation5 + $0x8] sm:$0xff]
    %v44 = vld [vmem:[#allocation5 + $0x10] sm:$0xff]
    %v45 = vld [vmem:[#allocation5 + $0x18] sm:$0xff]
    %v46 = vld [vmem:[%s2] sm:$0x1]
    %v48 = vlaneseq
    %v49 = vshrl.u32 %v48, 7
    %v50 = vsub.s32 0, %v49
    %v51 = vrot.slane %v46, %v50
    %vm53 = vcmask 261120
    %v55 = vsel %vm53, %v41, 0
    %57 = vmatprep.subr.mxu0 0.0
    %58 = vmatpush1.msra.mxu0 0.0
    %59 = vmatprep.subr.mxu0 0.0
    %60 = vmatpush1.msra.mxu0 0.0
    %61 = vmatprep.subr.mxu0 0.0
    %62 = vmatpush1.msra.mxu0 0.0
    %63 = vmatprep.subr.mxu0 0.0
    %64 = vmatpush1.msra.mxu0 0.0
    %65 = vmatprep.subr.mxu0 0.0
    %66 = vmatpush1.msra.mxu0 0.0
    %67 = vmatprep.subr.mxu0 0.0
    %68 = vmatpush1.msra.mxu0 0.0
    %69 = vmatprep.subr.mxu0 0.0
    %70 = vmatpush1.msra.mxu0 0.0
    %71 = vmatprep.subr.mxu0 0.0
    %72 = vmatpush1.msra.mxu0 0.0
    %73 = vmatprep.subr.mxu0 0.0
    %74 = vmatpush1.msra.mxu0 0.0
    %75 = vmatprep.subr.mxu0 0.0
    %76 = vmatpush1.msra.mxu0 0.0
    %77 = vmatprep.subr.mxu0 0.0
    %78 = vmatpush1.msra.mxu0 0.0
    %79 = vmatprep.subr.mxu0 0.0
    %80 = vmatpush1.msra.mxu0 0.0
    %81 = vmatprep.subr.mxu0 0.0
    %82 = vmatpush1.msra.mxu0 %v45
    %83 = vmatprep.subr.mxu0 0.0
    %84 = vmatpush1.msra.mxu0 %v44
    %85 = vmatprep.subr.mxu0 0.0
    %86 = vmatpush1.msra.mxu0 %v43
    %87 = vmatprep.subr.mxu0 0.0
    %88 = vmatpush1.msra.mxu0 %v42
    %89 = vmatprep.subr.mxu0 0.0
    %90 = vmatpush2.msra.mxu0 0.0
    %91 = vmatprep.subr.mxu0 0.0
    %92 = vmatpush2.msra.mxu0 0.0
    %93 = vmatprep.subr.mxu0 0.0
    %94 = vmatpush2.msra.mxu0 0.0
    %95 = vmatprep.subr.mxu0 0.0
    %96 = vmatpush2.msra.mxu0 0.0
    %97 = vmatprep.subr.mxu0 0.0
    %98 = vmatpush2.msra.mxu0 0.0
    %99 = vmatprep.subr.mxu0 0.0
    %100 = vmatpush2.msra.mxu0 0.0
    %101 = vmatprep.subr.mxu0 0.0
    %102 = vmatpush2.msra.mxu0 0.0
    %103 = vmatprep.subr.mxu0 0.0
    %104 = vmatpush2.msra.mxu0 0.0
    %105 = vmatprep.subr.mxu0 0.0
    %106 = vmatpush2.msra.mxu0 0.0
    %107 = vmatprep.subr.mxu0 0.0
    %108 = vmatpush2.msra.mxu0 0.0
    %109 = vmatprep.subr.mxu0 0.0
    %110 = vmatpush2.msra.mxu0 0.0
    %111 = vmatprep.subr.mxu0 0.0
    %112 = vmatpush2.msra.mxu0 0.0
    %113 = vmatprep.subr.mxu0 0.0
    %114 = vmatpush2.msra.mxu0 0.0
    %115 = vmatprep.subr.mxu0 0.0
    %116 = vmatpush2.msra.mxu0 0.0
    %117 = vmatprep.subr.mxu0 0.0
    %118 = vmatpush2.msra.mxu0 0.0
    %119 = vmatprep.subr.mxu0 0.0
    %120 = vmatpush2.msra.mxu0 0.0
    %121 = vmatprep.mubr.f32.mxu0 0.0
    %122 = vmatmul.mubr.f32.gmra.mxu0 %v55
    %v123 = vpop.f32.mrf.mxu0
    %v124 = vadd.f32 %v51, %v123
    %v125 = vpop.f32.mrf.mxu0
    %126 = vdwg.mxu0
    %v127 = vmul.f32 %v124, 0.5
    %v128 = vtanh.pop %v127
    %v129 = vmul.f32 %v128, 0.5
    %v130 = vadd.f32 %v129, 0.5
    %131 = vst [vmem:[#allocation7] sm:$0xff] %v130
    // Predicated region
    $region22: #{forward.1} parent=1 // pred_check
      _
    $region23: #{forward.1} parent=1 // pred_check_branch
      %133 = sbr.rel (0) target = $region25
    $region24: #{forward.1} parent=1 // pred_region
      %s135 = ssub.s32 128, 128
      %136 = vsyncadd [#allocation4], %s135
      %s138 = sshll.u32 [#allocation7], 4
      %s139 = int_to_ptr.vmem [resolvable:$true] %s138
      %141 = dma.vmem_to_hbm [thread:$0]  %s139, 128, %s3, [#allocation4]
    $region25: #{forward.1} parent=1 // pred_fallthru
      _
    // Predicated region
    $region26: #{forward.1} parent=1 // pred_check
      _
    $region27: #{forward.1} parent=1 // pred_check_branch
      %143 = sbr.rel (0) target = $region29
    $region28: #{forward.1} parent=1 // pred_region
      %144 = dma.done [#allocation4], 128
    $region29: #{forward.1} parent=1 // pred_fallthru
      _
    %145 = vsyncpa [#allocation3], 1
    %146 = vsyncpa [#allocation6], 1
    %147 = vsyncpa [#allocation4], 1

</llo_original>
